<compile_context>
chip_gen: v7x
topology: tpu7x:2x2x1
jax: 0.10.0
libtpu: 0.0.40
codegen_flags: <defaults>
</compile_context>

<pallas_src>
import functools

import jax
import jax.numpy as jnp
from jax.experimental import pallas as pl
from jax.experimental.pallas import tpu as pltpu

THRESHOLD = 1.0
DECAY = 0.9

LANES = 128
TARGET_BLOCK_ROWS = 4096              # 4096 x 128 x f32 = 2 MiB per stream block
VMEM_LIMIT_BYTES = 32 * 1024 * 1024   # 4 streams x 2 buffers x 2 MiB = 16 MiB + headroom


def _make_lif_kernel(threshold, decay):
    def kernel(inp_ref, mem_ref, spike_ref, mem_out_ref):
        # Compute in f32 on the VPU regardless of the (possibly bf16) I/O dtype.
        x = inp_ref[...].astype(jnp.float32)
        m = mem_ref[...].astype(jnp.float32)
        # mem = decay * mem + input_current
        mem_new = decay * m + x
        # One compare reused for both outputs (fewer VALU ops than
        # spike = cmp.astype(f32); mem * (1 - spike)).
        fired = mem_new >= threshold
        # spike = (mem >= threshold).float()
        spike_ref[...] = jnp.where(fired, 1.0, 0.0).astype(spike_ref.dtype)
        # mem = mem * (1 - spike)  ==  0 where fired, mem_new otherwise
        mem_out_ref[...] = jnp.where(fired, 0.0, mem_new).astype(mem_out_ref.dtype)

    return kernel


@functools.partial(jax.jit, static_argnames=("threshold", "decay"))
def lif_neuron(input_current, mem, *, threshold=THRESHOLD, decay=DECAY):
    """Pallas TPU LIF neuron forward. Returns (spike, mem) matching PyTorch."""
    assert input_current.shape == mem.shape
    orig_shape = input_current.shape
    n = input_current.size

    # Keep I/O in the caller's dtype: the kernel is bandwidth-bound, so bf16
    # inputs/outputs halve HBM traffic (spike values 0.0/1.0 are exact in bf16).
    io_dtype = jnp.result_type(input_current.dtype, mem.dtype)
    x = input_current.astype(io_dtype).reshape(-1)
    m = mem.astype(io_dtype).reshape(-1)

    # Only pad when numel is not a multiple of 128 (the common NCHW case with
    # H*W % 128 == 0 needs no pad, so the flatten/reshape are free bitcasts).
    pad = (-n) % LANES
    if pad:
        # TODO(synk): an in-kernel masked tail (scalar-prefetched n + masked
        # stores) would avoid this extra pad/slice HBM pass for ragged sizes.
        x = jnp.pad(x, (0, pad))
        m = jnp.pad(m, (0, pad))
    total_rows = (n + pad) // LANES
    x2 = x.reshape(total_rows, LANES)
    m2 = m.reshape(total_rows, LANES)

    # Block sizing: one big block when the whole tensor fits (full-extent
    # blocks are exempt from the sublane-multiple rule), otherwise 4096 rows
    # (a multiple of 8/16/32 sublanes, so valid for f32/bf16/8-bit dtypes)
    # with a ragged, masked last block via pl.cdiv.
    block_rows = total_rows if total_rows <= TARGET_BLOCK_ROWS else TARGET_BLOCK_ROWS
    grid = (pl.cdiv(total_rows, block_rows),)

    spec = pl.BlockSpec((block_rows, LANES), lambda i: (i, 0))

    spike2, mem2 = pl.pallas_call(
        _make_lif_kernel(float(threshold), float(decay)),
        out_shape=(
            jax.ShapeDtypeStruct((total_rows, LANES), io_dtype),
            jax.ShapeDtypeStruct((total_rows, LANES), io_dtype),
        ),
        grid=grid,
        in_specs=[spec, spec],
        out_specs=(spec, spec),
        # Reuse the membrane-state input buffer for the updated membrane state
        # (true in-place when the caller donates `mem`).
        input_output_aliases={1: 1},
        compiler_params=pltpu.CompilerParams(
            dimension_semantics=("parallel",),
            vmem_limit_bytes=VMEM_LIMIT_BYTES,
        ),
    )(x2, m2)

    spike_flat = spike2.reshape(-1)
    mem_flat = mem2.reshape(-1)
    if pad:
        spike_flat = spike_flat[:n]
        mem_flat = mem_flat[:n]
    return spike_flat.reshape(orig_shape), mem_flat.reshape(orig_shape)


def _lif_ref(input_current, mem, threshold=THRESHOLD, decay=DECAY):
    mem = decay * mem + input_current
    spike = (mem >= threshold).astype(jnp.float32)
    mem = mem * (1.0 - spike)
    return spike, mem


if __name__ == "__main__":
    key = jax.random.PRNGKey(0)
    k1, k2 = jax.random.split(key)
    # NCHW-shaped synthetic inputs (batch=2, channels=4, spatial=16x16)
    x = jax.random.normal(k1, (2, 4, 16, 16), dtype=jnp.float32) * 1.5
    mem0 = jax.random.normal(k2, (2, 4, 16, 16), dtype=jnp.float32)

    spike, mem_out = lif_neuron(x, mem0)
    jax.block_until_ready((spike, mem_out))

    spike_ref, mem_ref_val = _lif_ref(x, mem0)
    assert spike.shape == x.shape and mem_out.shape == x.shape
    assert jnp.allclose(spike, spike_ref), "spike mismatch"
    assert jnp.allclose(mem_out, mem_ref_val, atol=1e-6), "mem mismatch"

    print("KERNEL_OK")
</pallas_src>

<mosaic_0001>
module attributes {stable_mosaic.version = 11 : i64} {
  func.func @kernel(%arg0: i32, %arg1: memref<16x128xf32, #tpu.memory_space<vmem>>, %arg2: memref<16x128xf32, #tpu.memory_space<vmem>>, %arg3: memref<16x128xf32, #tpu.memory_space<vmem>>, %arg4: memref<16x128xf32, #tpu.memory_space<vmem>>) attributes {dimension_semantics = [#tpu.dimension_semantics<parallel>], iteration_bounds = array<i64: 1>, scalar_prefetch = 0 : i64, scratch_operands = 0 : i64, tpu.core_type = #tpu.core_type<tc>, window_params = [{transform_indices = @transform_0, window_bounds = array<i64: 16, 128>}, {transform_indices = @transform_1, window_bounds = array<i64: 16, 128>}, {transform_indices = @transform_2, window_bounds = array<i64: 16, 128>}, {transform_indices = @transform_3, window_bounds = array<i64: 16, 128>}]} {
    %c0 = arith.constant 0 : index
    %c0_0 = arith.constant 0 : index
    %0 = vector.load %arg1[%c0, %c0_0] : memref<16x128xf32, #tpu.memory_space<vmem>>, vector<16x128xf32>
    %c0_1 = arith.constant 0 : index
    %c0_2 = arith.constant 0 : index
    %1 = vector.load %arg2[%c0_1, %c0_2] : memref<16x128xf32, #tpu.memory_space<vmem>>, vector<16x128xf32>
    %cst = arith.constant 0.899999976 : f32
    %2 = vector.broadcast %cst : f32 to vector<16x128xf32>
    %3 = arith.mulf %2, %1 : vector<16x128xf32>
    %4 = arith.addf %3, %0 : vector<16x128xf32>
    %cst_3 = arith.constant 1.000000e+00 : f32
    %5 = vector.broadcast %cst_3 : f32 to vector<16x128xf32>
    %6 = arith.cmpf oge, %4, %5 : vector<16x128xf32>
    %cst_4 = arith.constant 1.000000e+00 : f32
    %cst_5 = arith.constant 0.000000e+00 : f32
    %7 = vector.broadcast %cst_4 : f32 to vector<16x128xf32>
    %8 = vector.broadcast %cst_5 : f32 to vector<16x128xf32>
    %9 = arith.select %6, %7, %8 : vector<16x128xi1>, vector<16x128xf32>
    %c0_6 = arith.constant 0 : index
    %c0_7 = arith.constant 0 : index
    %10 = vector.load %arg3[%c0_6, %c0_7] : memref<16x128xf32, #tpu.memory_space<vmem>>, vector<16x128xf32>
    tpu.vector_store %arg3[%c0_6, %c0_7], %9 {strides = array<i32>} : memref<16x128xf32, #tpu.memory_space<vmem>>, vector<16x128xf32>,
    %cst_8 = arith.constant 0.000000e+00 : f32
    %11 = vector.broadcast %cst_8 : f32 to vector<16x128xf32>
    %12 = arith.select %6, %11, %4 : vector<16x128xi1>, vector<16x128xf32>
    %c0_9 = arith.constant 0 : index
    %c0_10 = arith.constant 0 : index
    %13 = vector.load %arg4[%c0_9, %c0_10] : memref<16x128xf32, #tpu.memory_space<vmem>>, vector<16x128xf32>
    tpu.vector_store %arg4[%c0_9, %c0_10], %12 {strides = array<i32>} : memref<16x128xf32, #tpu.memory_space<vmem>>, vector<16x128xf32>,
    return
  }
  func.func @transform_0(%arg0: i32) -> (i32, i32) {
    %c0_i32 = arith.constant 0 : i32
    %c0_i32_0 = arith.constant 0 : i32
    return %arg0, %c0_i32 : i32, i32
  }
  func.func @transform_1(%arg0: i32) -> (i32, i32) {
    %c0_i32 = arith.constant 0 : i32
    %c0_i32_0 = arith.constant 0 : i32
    return %arg0, %c0_i32 : i32, i32
  }
  func.func @transform_2(%arg0: i32) -> (i32, i32) {
    %c0_i32 = arith.constant 0 : i32
    %c0_i32_0 = arith.constant 0 : i32
    return %arg0, %c0_i32 : i32, i32
  }
  func.func @transform_3(%arg0: i32) -> (i32, i32) {
    %c0_i32 = arith.constant 0 : i32
    %c0_i32_0 = arith.constant 0 : i32
    return %arg0, %c0_i32 : i32, i32
  }
}

</mosaic_0001>

<llo_original>
// kernel: lif_neuron.1
$region0: #{lif_neuron.1}
  #allocation0 [shape = 'u32[]', space=smem, size = 0x4, offset = 0x4, fixed_abs, tag = 'smem constant byte address 0x4 - core index']
  #allocation1 [shape = 'u32[144,128]{1,0:T(1,128)}', space=vmem, size = 0x12000, scoped, tag = 'internal scratch']
  %s0 = inlined_call_operand.vmem [shape: f32[16,128], index: 0, kind: input, shape index: {}]
  %s1 = inlined_call_operand.vmem [shape: f32[16,128], index: 1, kind: input, shape index: {}, may-alias: {1,3}]
  %s2 = inlined_call_operand.vmem [shape: f32[16,128], index: 2, kind: output, shape index: {0}]
  %s3 = inlined_call_operand.vmem [shape: f32[16,128], index: 3, kind: output, shape index: {1}, may-alias: {1,3}]
  %4 = xla_tuple %s2, %s3
  %s5 = sld [smem:[#allocation0]]
  $region26: #{lif_neuron.1} parent=0
    _
  %s7 = ssub.s32 1, %s5
  %s8 = scalar_select 0, %s7, %s5
  // Predicated region
  $region2: #{lif_neuron.1} parent=0 // pred_check
    _
  $region3: #{lif_neuron.1} parent=0 // pred_check_branch
    %10 = sbr.rel (0) target = $region5
  $region4: #{lif_neuron.1} parent=0 // pred_region
    _
  $region5: #{lif_neuron.1} parent=0 // pred_fallthru
    _
  // Predicated region
  $region6: #{lif_neuron.1} parent=0 // pred_check
    _
  $region7: #{lif_neuron.1} parent=0 // pred_check_branch
    %12 = sbr.rel (0) target = $region9
  $region8: #{lif_neuron.1} parent=0 // pred_region
    _
  $region9: #{lif_neuron.1} parent=0 // pred_fallthru
    _
  %v13 = vld [vmem:[%s0] sm:$0xff]
  %v14 = vld [vmem:[%s0 + $0x8] sm:$0xff]
  %v15 = vld [vmem:[%s1] sm:$0xff]
  %v16 = vld [vmem:[%s1 + $0x8] sm:$0xff]
  %v17 = vmul.f32 %v15, 0.9
  %v18 = vmul.f32 %v16, 0.9
  %v19 = vadd.f32 %v17, %v13
  %v20 = vadd.f32 %v18, %v14
  %vm21 = vcmp.ge.f32.partialorder %v19, 1.0
  %vm22 = vcmp.ge.f32.partialorder %v20, 1.0
  %v23 = vsel %vm21, 1.0, 0.0
  %v24 = vsel %vm22, 1.0, 0.0
  %25 = vst [vmem:[%s2] sm:$0xff] %v23
  %26 = vst [vmem:[%s2 + $0x8] sm:$0xff] %v24
  %v27 = vsel %vm21, 0.0, %v19
  %v28 = vsel %vm22, 0.0, %v20
  %29 = vst [vmem:[%s3] sm:$0xff] %v27
  %30 = vst [vmem:[%s3 + $0x8] sm:$0xff] %v28
  // Predicated region
  $region10: #{lif_neuron.1} parent=0 // pred_check
    _
  $region11: #{lif_neuron.1} parent=0 // pred_check_branch
    %32 = sbr.rel (0) target = $region13
  $region12: #{lif_neuron.1} parent=0 // pred_region
    _
  $region13: #{lif_neuron.1} parent=0 // pred_fallthru
    _
  // Predicated region
  $region14: #{lif_neuron.1} parent=0 // pred_check
    _
  $region15: #{lif_neuron.1} parent=0 // pred_check_branch
    %34 = sbr.rel (0) target = $region17
  $region16: #{lif_neuron.1} parent=0 // pred_region
    _
  $region17: #{lif_neuron.1} parent=0 // pred_fallthru
    _
  // Predicated region
  $region18: #{lif_neuron.1} parent=0 // pred_check
    _
  $region19: #{lif_neuron.1} parent=0 // pred_check_branch
    %36 = sbr.rel (0) target = $region21
  $region20: #{lif_neuron.1} parent=0 // pred_region
    _
  $region21: #{lif_neuron.1} parent=0 // pred_fallthru
    _
  // Predicated region
  $region22: #{lif_neuron.1} parent=0 // pred_check
    _
  $region23: #{lif_neuron.1} parent=0 // pred_check_branch
    %38 = sbr.rel (0) target = $region25
  $region24: #{lif_neuron.1} parent=0 // pred_region
    _
  $region25: #{lif_neuron.1} parent=0 // pred_fallthru
    _

</llo_original>
